<compile_context>
chip_gen: v7x
topology: tpu7x:2x2x1
jax: 0.10.0
libtpu: 0.0.40
codegen_flags: <defaults>
</compile_context>

<pallas_src>
import functools

import jax
import jax.numpy as jnp
from jax import lax
from jax.experimental import pallas as pl
from jax.experimental.pallas import tpu as pltpu


def _round_up(n, m):
    return (n + m - 1) // m * m


def _sublane_packing(dtype):
    """Sublane packing granularity for a dtype (8 f32, 16 bf16, 32 int8)."""
    return max(8, 32 // jnp.dtype(dtype).itemsize)


def _vmem_plan():
    """Returns (per-step footprint target bytes, vmem_limit_bytes or None)."""
    try:
        kind = jax.devices()[0].device_kind.lower()
    except Exception:  # pragma: no cover - defensive
        kind = ""
    if any(tag in kind for tag in ("v4", "v5", "v6")):
        # 128 MiB physical VMEM: use big tiles and raise the scoped limit.
        return 72 << 20, 96 << 20
    # v7x (64 MiB physical / 32 MiB scoped default) and unknown chips:
    # stay within the default scoped limit with headroom.
    return 20 << 20, None


def _step_footprint(C, TH, W, *, in_itemsize, out_itemsize, packing):
    """Estimated per-grid-step VMEM footprint: lane padding, double-buffered
    input, halo, 'none'-path output buffers, and in-kernel f32 temporaries."""
    wpad = _round_up(W, 128)            # W sits on the lane axis
    elems = C * TH * wpad
    f32_tmps = 6 * elems * 4            # x, x_right, x_down, x_diff, y_diff, diff
    in_bufs = 2 * elems * in_itemsize   # double-buffered main input block
    halo_bufs = 2 * C * packing * wpad * in_itemsize
    out_bufs = 2 * elems * out_itemsize
    return f32_tmps + in_bufs + halo_bufs + out_bufs


def _pick_block_h(C, H, W, *, packing, in_itemsize, out_itemsize, target_bytes):
    """Largest TH (multiple of `packing`, dividing H) whose footprint fits."""
    if H % packing != 0:
        return H  # cannot halo-tile cleanly; fall back to a single H tile

    def fits(th):
        return _step_footprint(
            C, th, W, in_itemsize=in_itemsize, out_itemsize=out_itemsize,
            packing=packing) <= target_bytes

    if fits(H):
        return H
    best = packing
    th = packing
    while th < H:
        if H % th == 0 and fits(th):
            best = th
        th += packing
    return best


def _tv_diff(x, nxt_row, row_base, *, p, eps, H):
    """TV 'diff' tensor for one (1, C, TH, W) block (f32 math).

    x:        (1, C, TH, W) f32 block covering global rows [row_base, row_base+TH)
    nxt_row:  (1, C, 1, W) f32 image row directly below the block, or None for
              a halo-free (single-tile) block.  The wrapped/clamped data is
              never observable: the global last row is replicate-padded and
              therefore zeroed.
    """
    TH, W = x.shape[2], x.shape[3]

    # Small broadcastable edge masks (no full-block int32 iotas).
    col = lax.broadcasted_iota(jnp.int32, (1, 1, 1, W), 3)
    row = lax.broadcasted_iota(jnp.int32, (1, 1, TH, 1), 2)
    last_col = col == W - 1
    last_row_local = row == TH - 1
    last_row_global = (row + row_base) == H - 1

    # x_right[..., w] = x[..., w+1]   (XLU lane rotate; free-ish slot)
    x_right = pltpu.roll(x, shift=W - 1, axis=3)
    # replicate pad => difference at the last column is exactly zero.
    x_diff = jnp.where(last_col, 0.0, x - x_right)

    # x_down[..., r, :] = x[..., r+1, :]   (XLU sublane rotate)
    x_down = pltpu.roll(x, shift=TH - 1, axis=2)
    if nxt_row is not None:
        # the block's last row must use the halo row (row below the block)
        x_down = jnp.where(last_row_local, nxt_row, x_down)
    # the *global* last row is replicate-padded => zero difference.
    y_diff = jnp.where(last_row_global, 0.0, x - x_down)

    diff = x_diff * x_diff + y_diff * y_diff
    if p == 1:
        diff = jnp.sqrt(jnp.mean(diff + eps, axis=1, keepdims=True))
    return diff


def _block_diff(x_ref, nxt_ref, *, p, eps, H):
    TH = x_ref.shape[2]
    row_base = pl.program_id(1) * TH
    x = x_ref[...].astype(jnp.float32)                       # (1, C, TH, W)
    nxt = None
    if nxt_ref is not None:
        nxt = nxt_ref[0:1, :, 0:1, :].astype(jnp.float32)    # (1, C, 1, W)
    return _tv_diff(x, nxt, row_base, p=p, eps=eps, H=H)


def _reduce_kernel_halo(x_ref, nxt_ref, out_ref, *, p, eps, H):
    partial = jnp.sum(_block_diff(x_ref, nxt_ref, p=p, eps=eps, H=H))
    out_ref[...] = jnp.full(out_ref.shape, partial, dtype=out_ref.dtype)


def _reduce_kernel_nohalo(x_ref, out_ref, *, p, eps, H):
    partial = jnp.sum(_block_diff(x_ref, None, p=p, eps=eps, H=H))
    out_ref[...] = jnp.full(out_ref.shape, partial, dtype=out_ref.dtype)


def _map_kernel_halo(x_ref, nxt_ref, o_ref, *, p, eps, H):
    o_ref[...] = _block_diff(x_ref, nxt_ref, p=p, eps=eps, H=H).astype(o_ref.dtype)


def _map_kernel_nohalo(x_ref, o_ref, *, p, eps, H):
    o_ref[...] = _block_diff(x_ref, None, p=p, eps=eps, H=H).astype(o_ref.dtype)


def tv_loss(x, target=None, *, p=1, reduction="mean", eps=1e-8, block_h=None):
    """Pallas TPU implementation of TVLoss.forward (target is ignored)."""
    del target  # ignored, as in the PyTorch reference
    if p not in (1, 2):
        raise ValueError("p must be 1 or 2")
    if reduction not in ("mean", "sum", "none"):
        raise ValueError("reduction must be 'mean', 'sum', or 'none'")
    if x.ndim != 4:
        raise ValueError("input must be 4D (N, C, H, W)")
    if not jnp.issubdtype(x.dtype, jnp.floating):
        x = x.astype(jnp.float32)
    N, C, H, W = x.shape
    out_dtype = x.dtype
    c_out = 1 if p == 1 else C

    packing = _sublane_packing(x.dtype)
    target_bytes, vmem_limit = _vmem_plan()
    in_itemsize = jnp.dtype(x.dtype).itemsize
    out_itemsize = jnp.dtype(out_dtype).itemsize if reduction == "none" else 0

    if block_h is None:
        TH = _pick_block_h(C, H, W, packing=packing, in_itemsize=in_itemsize,
                           out_itemsize=out_itemsize, target_bytes=target_bytes)
        # Guarantee >= 2 grid steps when N == 1 so both v7x TensorCores
        # get work (harmless single-TC: just one extra small halo DMA).
        if N == 1 and TH == H and H % (2 * packing) == 0:
            TH = H // 2
    else:
        TH = min(int(block_h), H)
        if TH != H and not (TH > 0 and H % packing == 0 and TH % packing == 0
                            and H % TH == 0):
            raise ValueError(
                f"block_h must divide H and be a multiple of {packing}")
    HT = H // TH
    has_halo = HT > 1

    # Main block: (1, C, TH, W).  Halo (only when tiling H): one sublane-
    # packing block of rows starting right below the tile (clamped); only its
    # first row is consumed and it is masked out at the global last row.
    main_spec = pl.BlockSpec((1, C, TH, W), lambda n, h: (n, 0, h, 0))
    in_specs = [main_spec]
    operands = [x]
    if has_halo:
        hb = TH // packing
        last_hb = H // packing - 1
        halo_spec = pl.BlockSpec(
            (1, C, packing, W),
            lambda n, h: (n, 0, jnp.minimum((h + 1) * hb, last_hb), 0))
        in_specs.append(halo_spec)
        operands.append(x)

    cp_kwargs = dict(dimension_semantics=("parallel", "parallel"))
    if vmem_limit is not None:
        cp_kwargs["vmem_limit_bytes"] = int(vmem_limit)
    compiler_params = pltpu.CompilerParams(**cp_kwargs)

    if reduction == "none":
        kernel = functools.partial(
            _map_kernel_halo if has_halo else _map_kernel_nohalo,
            p=p, eps=eps, H=H)
        return pl.pallas_call(
            kernel,
            out_shape=jax.ShapeDtypeStruct((N, c_out, H, W), out_dtype),
            grid_spec=pltpu.PrefetchScalarGridSpec(
                num_scalar_prefetch=0,
                grid=(N, HT),
                in_specs=in_specs,
                out_specs=pl.BlockSpec((1, c_out, TH, W),
                                       lambda n, h: (n, 0, h, 0)),
            ),
            compiler_params=compiler_params,
        )(*operands)

    kernel = functools.partial(
        _reduce_kernel_halo if has_halo else _reduce_kernel_nohalo,
        p=p, eps=eps, H=H)
    # Each grid step writes its own lane-dense (8, 128) partial-sum block
    # (no cross-step dependency => both grid axes stay "parallel"); the
    # wrapper finishes the reduction.
    partials = pl.pallas_call(
        kernel,
        out_shape=jax.ShapeDtypeStruct((N, HT, 8, 128), jnp.float32),
        grid_spec=pltpu.PrefetchScalarGridSpec(
            num_scalar_prefetch=0,
            grid=(N, HT),
            in_specs=in_specs,
            out_specs=pl.BlockSpec((1, 1, 8, 128), lambda n, h: (n, h, 0, 0)),
        ),
        compiler_params=compiler_params,
    )(*operands)

    total = jnp.sum(partials[:, :, 0, 0])
    if reduction == "sum":
        return total.astype(out_dtype)
    # 'mean': p=1 diff has shape (N, 1, H, W); p=2 has shape (N, C, H, W).
    n_elems = N * c_out * H * W
    return (total / jnp.float32(n_elems)).astype(out_dtype)


def _tv_loss_ref(x, *, p=1, reduction="mean", eps=1e-8):
    """Pure-JAX reference mirroring the PyTorch forward."""
    x = x.astype(jnp.float32)
    xp = jnp.pad(x, ((0, 0), (0, 0), (0, 1), (0, 1)), mode="edge")
    x_diff = xp[..., :-1, :-1] - xp[..., :-1, 1:]
    y_diff = xp[..., :-1, :-1] - xp[..., 1:, :-1]
    diff = x_diff ** 2 + y_diff ** 2
    if p == 1:
        diff = jnp.sqrt(jnp.mean(diff + eps, axis=1, keepdims=True))
    if reduction == "mean":
        return diff.mean()
    if reduction == "sum":
        return diff.sum()
    return diff


if __name__ == "__main__":
    key = jax.random.PRNGKey(0)
    x = jax.random.normal(key, (2, 4, 16, 16), dtype=jnp.float32)

    cases = [
        dict(p=1, reduction="mean", block_h=None),  # single tile, halo-free
        dict(p=1, reduction="mean", block_h=8),     # tiled H + halo path
        dict(p=2, reduction="sum", block_h=8),
        dict(p=1, reduction="none", block_h=8),
        dict(p=2, reduction="none", block_h=None),
    ]
    for c in cases:
        out = jax.block_until_ready(
            tv_loss(x, p=c["p"], reduction=c["reduction"], block_h=c["block_h"]))
        ref = _tv_loss_ref(x, p=c["p"], reduction=c["reduction"])
        assert jnp.allclose(out, ref, rtol=1e-5, atol=1e-5), (c, out, ref)

    # bf16 path: 16-row sublane packing, auto halo tiling + N==1 two-tile split.
    xb = jax.random.normal(jax.random.PRNGKey(1), (1, 3, 32, 16),
                           dtype=jnp.bfloat16)
    outb = jax.block_until_ready(tv_loss(xb, p=1, reduction="mean"))
    refb = _tv_loss_ref(xb, p=1, reduction="mean")
    assert jnp.allclose(jnp.float32(outb), refb, rtol=2e-2, atol=2e-2), (outb, refb)

    print("KERNEL_OK")
</pallas_src>

<mosaic_0001>
module attributes {stable_mosaic.version = 11 : i64} {
  func.func @_reduce_kernel_nohalo(%arg0: i32, %arg1: i32, %arg2: memref<1x4x16x16xf32, #tpu.memory_space<vmem>>, %arg3: memref<1x1x8x128xf32, #tpu.memory_space<vmem>>) attributes {dimension_semantics = [#tpu.dimension_semantics<parallel>, #tpu.dimension_semantics<parallel>], iteration_bounds = array<i64: 2, 1>, scalar_prefetch = 0 : i64, scratch_operands = 0 : i64, tpu.core_type = #tpu.core_type<tc>, window_params = [{transform_indices = @transform_0, window_bounds = array<i64: 1, 4, 16, 16>}, {transform_indices = @transform_1, window_bounds = array<i64: 1, 1, 8, 128>}]} {
    %c16_i32 = arith.constant 16 : i32
    %0 = arith.muli %arg1, %c16_i32 : i32
    %c0 = arith.constant 0 : index
    %c0_0 = arith.constant 0 : index
    %c0_1 = arith.constant 0 : index
    %c0_2 = arith.constant 0 : index
    %1 = vector.load %arg2[%c0, %c0_0, %c0_1, %c0_2] : memref<1x4x16x16xf32, #tpu.memory_space<vmem>>, vector<1x4x16x16xf32>
    %2 = tpu.iota {dimensions = array<i32: 3>} : vector<1x1x1x16xi32>
    %3 = tpu.iota {dimensions = array<i32: 2>} : vector<1x1x16x1xi32>
    %c15_i32 = arith.constant 15 : i32
    %4 = vector.broadcast %c15_i32 : i32 to vector<1x1x1x16xi32>
    %5 = arith.cmpi eq, %2, %4 : vector<1x1x1x16xi32>
    %6 = vector.broadcast %0 : i32 to vector<1x1x16x1xi32>
    %7 = arith.addi %3, %6 : vector<1x1x16x1xi32>
    %c15_i32_3 = arith.constant 15 : i32
    %8 = vector.broadcast %c15_i32_3 : i32 to vector<1x1x16x1xi32>
    %9 = arith.cmpi eq, %7, %8 : vector<1x1x16x1xi32>
    %c15_i32_4 = arith.constant 15 : i32
    %10 = tpu.dynamic_rotate %1 by %c15_i32_4 dim 3 : vector<1x4x16x16xf32>, i32 -> vector<1x4x16x16xf32>
    %11 = arith.subf %1, %10 : vector<1x4x16x16xf32>
    %cst = arith.constant 0.000000e+00 : f32
    %12 = vector.shape_cast %5 : vector<1x1x1x16xi1> to vector<1x1x1x16xi1>
    %13 = vector.broadcast %12 : vector<1x1x1x16xi1> to vector<1x4x16x16xi1>
    %14 = vector.broadcast %cst : f32 to vector<1x4x16x16xf32>
    %15 = arith.select %13, %14, %11 : vector<1x4x16x16xi1>, vector<1x4x16x16xf32>
    %c15_i32_5 = arith.constant 15 : i32
    %16 = tpu.dynamic_rotate %1 by %c15_i32_5 dim 2 : vector<1x4x16x16xf32>, i32 -> vector<1x4x16x16xf32>
    %17 = arith.subf %1, %16 : vector<1x4x16x16xf32>
    %cst_6 = arith.constant 0.000000e+00 : f32
    %18 = vector.shape_cast %9 : vector<1x1x16x1xi1> to vector<1x1x16x1xi1>
    %19 = vector.broadcast %18 : vector<1x1x16x1xi1> to vector<1x4x16x16xi1>
    %20 = vector.broadcast %cst_6 : f32 to vector<1x4x16x16xf32>
    %21 = arith.select %19, %20, %17 : vector<1x4x16x16xi1>, vector<1x4x16x16xf32>
    %22 = arith.mulf %15, %15 : vector<1x4x16x16xf32>
    %23 = arith.mulf %21, %21 : vector<1x4x16x16xf32>
    %24 = arith.addf %22, %23 : vector<1x4x16x16xf32>
    %cst_7 = arith.constant 9.99999993E-9 : f32
    %25 = vector.broadcast %cst_7 : f32 to vector<1x4x16x16xf32>
    %26 = arith.addf %24, %25 : vector<1x4x16x16xf32>
    %cst_8 = arith.constant dense<0.000000e+00> : vector<1x16x16xf32>
    %27 = vector.multi_reduction <add>, %26, %cst_8 [1] : vector<1x4x16x16xf32> to vector<1x16x16xf32>
    %28 = vector.shape_cast %27 : vector<1x16x16xf32> to vector<1x1x16x16xf32>
    %cst_9 = arith.constant 4.000000e+00 : f32
    %29 = vector.broadcast %cst_9 : f32 to vector<1x1x16x16xf32>
    %30 = arith.divf %28, %29 : vector<1x1x16x16xf32>
    %31 = math.sqrt %30 : vector<1x1x16x16xf32>
    %32 = vector.shape_cast %31 : vector<1x1x16x16xf32> to vector<1x1x1x16x16xf32>
    %cst_10 = arith.constant dense<0.000000e+00> : vector<1xf32>
    %33 = vector.multi_reduction <add>, %32, %cst_10 [1, 2, 3, 4] : vector<1x1x1x16x16xf32> to vector<1xf32>
    %34 = vector.shape_cast %33 : vector<1xf32> to vector<1x1x1x1x1xf32>
    %35 = vector.extract %34[0, 0, 0, 0, 0] : f32 from vector<1x1x1x1x1xf32>
    %36 = vector.broadcast %35 : f32 to vector<1x1x8x128xf32>
    %c0_11 = arith.constant 0 : index
    %c0_12 = arith.constant 0 : index
    %c0_13 = arith.constant 0 : index
    %c0_14 = arith.constant 0 : index
    %37 = vector.load %arg3[%c0_11, %c0_12, %c0_13, %c0_14] : memref<1x1x8x128xf32, #tpu.memory_space<vmem>>, vector<1x1x8x128xf32>
    tpu.vector_store %arg3[%c0_11, %c0_12, %c0_13, %c0_14], %36 {strides = array<i32>} : memref<1x1x8x128xf32, #tpu.memory_space<vmem>>, vector<1x1x8x128xf32>,
    return
  }
  func.func @transform_0(%arg0: i32, %arg1: i32) -> (i32, i32, i32, i32) {
    %c0_i32 = arith.constant 0 : i32
    %c0_i32_0 = arith.constant 0 : i32
    %c0_i32_1 = arith.constant 0 : i32
    return %arg0, %c0_i32, %arg1, %c0_i32_0 : i32, i32, i32, i32
  }
  func.func @transform_1(%arg0: i32, %arg1: i32) -> (i32, i32, i32, i32) {
    %c0_i32 = arith.constant 0 : i32
    %c0_i32_0 = arith.constant 0 : i32
    %c0_i32_1 = arith.constant 0 : i32
    return %arg0, %arg1, %c0_i32, %c0_i32_0 : i32, i32, i32, i32
  }
}

</mosaic_0001>

<llo_original>
// kernel: tpu_custom_call.1
$region0: #{tpu_custom_call.1}
  #allocation0 [shape = 'u32[]', space=smem, size = 0x4, offset = 0x4, fixed_abs, tag = 'smem constant byte address 0x4 - core index']
  #allocation1 [shape = 'u32[144,128]{1,0:T(1,128)}', space=vmem, size = 0x12000, scoped, tag = 'internal scratch']
  %s0 = inlined_call_operand.hbm [shape: f32[2,4,16,16], index: 0, kind: input, shape index: {}]
  %s1 = inlined_call_operand.hbm [shape: f32[2,1,8,128], index: 1, kind: output, shape index: {}]
  %s2 = sld [smem:[#allocation0]]
  $region41: #{tpu_custom_call.1} parent=0
    _
  %s4 = ssub.s32 1, %s2
  %s5 = scalar_select 0, %s4, %s2
  $region1: #{tpu_custom_call.1} parent=0
    #allocation2 [shape = 'u8[65536]{0}', space=vmem, size = 0x10000, scoped, tag = 'input window, operand 0']
    #allocation3 [shape = 's32[2]{0}', space=sflag, size = 0x8, scoped, tag = 'scoped memory for tpu_custom_call.1']
    #allocation4 [shape = 's32[2]{0}', space=sflag, size = 0x8, scoped, tag = 'scoped memory for tpu_custom_call.1']
    #allocation5 [shape = 'u8[8192]{0}', space=vmem, size = 0x2000, scoped, tag = 'output window, operand 0']
    %6 = vsyncpa [#allocation3], 0
    %s7 = scalar_lea.sflag [#allocation3], 1
    %8 = vsyncpa %s7, 0
    %9 = vsyncpa [#allocation4], 0
    %s10 = scalar_lea.sflag [#allocation4], 1
    %11 = vsyncpa %s10, 0
    loop: start=0, step=1, limit=4
    $region2: #{tpu_custom_call.1} parent=1 // loop_pre_header
      _
    $region3: #{tpu_custom_call.1} parent=1 // loop_header
      %s13 = sphi 0, %s17
      %p14 = scmp.ge.s32.totalorder %s13, 4
      %s20 = sphi 0, %s32
      %s21 = sphi 0, %s28
      %s22 = sphi 0, %s20
      %s23 = sphi 0, %s21
      %s24 = sphi 0, %s22
      %s25 = sphi 0, %s23
      %s37 = sphi 0, %s39
      %s40 = sphi 0, %s37
      %s41 = sphi 0, %s40
      %s57 = sphi 0, %s41
      %s65 = sphi 0, %s67
      %s68 = sphi 0, %s65
      %s69 = sphi 0, %s68
      %s85 = sphi 0, %s69
    $region4: #{tpu_custom_call.1} parent=1 // loop_header_branch
      %16 = sbr.rel (%p14) target = $region8
    $region5: #{tpu_custom_call.1} parent=1 // loop_body
      %s18 = ssub.s32 %s13, 1
      %s19 = ssub.s32 %s13, 2
      %s26 = sadd.s32 1, %s21
      %p27 = scmp.ge.s32.totalorder %s26, 1
      %s28 = scalar_select %p27, 0, %s26
      %s29 = sadd.s32 1, %s20
      %s30 = scalar_select %p27, %s29, %s20
      %p31 = scmp.ge.s32.totalorder %s30, 2
      %s32 = scalar_select %p31, 0, %s30
      %s33 = ssub.s32 %s20, %s32
      %s34 = ssub.s32 %s21, %s28
      %s35 = sor.u32 %s33, %s34
      %p36 = scmp.eq.s32.totalorder %s35, 0
      %s38 = sadd.s32 %s37, 1
      %s39 = scalar_select %p36, %s37, %s38
      %p42 = pneg %p36
      %p43 = scmp.eq.s32.totalorder %s13, 1
      %p44 = por %p42, %p43
      %p45 = scmp.ne.s32.totalorder %s37, %s40
      %p46 = scmp.eq.s32.totalorder %s13, 0
      %p47 = por %p45, %p46
      %p48 = scmp.ne.s32.totalorder %s37, %s40
      %p49 = scmp.eq.s32.totalorder %s18, 1
      %p50 = por %p48, %p49
      %p51 = scmp.ne.s32.totalorder %s40, %s41
      %p52 = scmp.eq.s32.totalorder %s18, 0
      %p53 = por %p51, %p52
      %p54 = scmp.ne.s32.totalorder %s40, %s41
      %p55 = scmp.eq.s32.totalorder %s19, 1
      %p56 = por %p54, %p55
      %p58 = scmp.ne.s32.totalorder %s41, %s57
      %p59 = scmp.eq.s32.totalorder %s19, 0
      %p60 = por %p58, %p59
      %s61 = ssub.s32 %s20, %s32
      %s62 = ssub.s32 %s21, %s28
      %s63 = sor.u32 %s61, %s62
      %p64 = scmp.eq.s32.totalorder %s63, 0
      %s66 = sadd.s32 %s65, 1
      %s67 = scalar_select %p64, %s65, %s66
      %p70 = pneg %p64
      %p71 = scmp.eq.s32.totalorder %s13, 1
      %p72 = por %p70, %p71
      %p73 = scmp.ne.s32.totalorder %s65, %s68
      %p74 = scmp.eq.s32.totalorder %s13, 0
      %p75 = por %p73, %p74
      %p76 = scmp.ne.s32.totalorder %s65, %s68
      %p77 = scmp.eq.s32.totalorder %s18, 1
      %p78 = por %p76, %p77
      %p79 = scmp.ne.s32.totalorder %s68, %s69
      %p80 = scmp.eq.s32.totalorder %s18, 0
      %p81 = por %p79, %p80
      %p82 = scmp.ne.s32.totalorder %s68, %s69
      %p83 = scmp.eq.s32.totalorder %s19, 1
      %p84 = por %p82, %p83
      %p86 = scmp.ne.s32.totalorder %s69, %s85
      %p87 = scmp.eq.s32.totalorder %s19, 0
      %p88 = por %p86, %p87
      %p89 = scmp.le.s32.totalorder 1, %s13
      %p90 = scmp.lt.s32.totalorder %s13, 3
      %p91 = pnand %p89, %p90
      %p92 = pneg %p91
      // Predicated region
      $region9: #{tpu_custom_call.1} parent=5 // pred_check
        _
      $region10: #{tpu_custom_call.1} parent=5 // pred_check_branch
        %94 = sbr.rel (%p91) target = $region12
      $region11: #{tpu_custom_call.1} parent=5 // pred_region
        %s95 = ssub.s32 %s13, 1
      $region12: #{tpu_custom_call.1} parent=5 // pred_fallthru
        _
      %p96 = scmp.lt.s32.totalorder %s13, 2
      // Predicated region
      $region13: #{tpu_custom_call.1} parent=5 // pred_check
        %p97 = pneg %p96
      $region14: #{tpu_custom_call.1} parent=5 // pred_check_branch
        %99 = sbr.rel (%p97) target = $region16
      $region15: #{tpu_custom_call.1} parent=5 // pred_region
        // Predicated region
        $region17: #{tpu_custom_call.1} parent=15 // pred_check
          %p100 = pneg %p47
        $region18: #{tpu_custom_call.1} parent=15 // pred_check_branch
          %102 = sbr.rel (%p100) target = $region20
        $region19: #{tpu_custom_call.1} parent=15 // pred_region
          %s103 = sand.u32 %s37, 1
          %s104 = scalar_lea.sflag [#allocation3], %s103
          %s105 = sand.u32 %s37, 1
          %s106 = smul.addr %s105, 64
          %s107 = scalar_lea.vmem [#allocation2], %s106
          %s108 = smul.u32 2, %s21
          %s110 = ssub.s32 1024, 1024
          %111 = vsyncadd %s104, %s110
          %s112 = smul.addr %s20, 8
          %s113 = sadd.s32 %s108, %s112
          %s114 = smul.addr %s113, 128
          %s115 = scalar_lea.hbm %s0, %s114
          %s116 = sshll.u32 %s107, 4
          %s117 = int_to_ptr.vmem [resolvable:$true] %s116
          %122 = dma.hbm_to_vmem [thread:$0]  %s115, 1024, %s117, %s104, 128, 128, 8
        $region20: #{tpu_custom_call.1} parent=15 // pred_fallthru
          _
      $region16: #{tpu_custom_call.1} parent=5 // pred_fallthru
        _
      %p123 = scmp.le.s32.totalorder 1, %s13
      %p124 = scmp.lt.s32.totalorder %s13, 3
      %p125 = pnand %p123, %p124
      %p126 = pneg %p125
      // Predicated region
      $region21: #{tpu_custom_call.1} parent=5 // pred_check
        _
      $region22: #{tpu_custom_call.1} parent=5 // pred_check_branch
        %128 = sbr.rel (%p125) target = $region24
      $region23: #{tpu_custom_call.1} parent=5 // pred_region
        %s129 = ssub.s32 %s13, 1
        %s130 = sand.u32 %s40, 1
        %s131 = scalar_lea.sflag [#allocation3], %s130
        %s132 = sand.u32 %s40, 1
        %s133 = smul.addr %s132, 64
        %s134 = scalar_lea.vmem [#allocation2], %s133
        // Predicated region
        $region25: #{tpu_custom_call.1} parent=23 // pred_check
          %p135 = pneg %p53
        $region26: #{tpu_custom_call.1} parent=23 // pred_check_branch
          %137 = sbr.rel (%p135) target = $region28
        $region27: #{tpu_custom_call.1} parent=23 // pred_region
          %138 = dma.done %s131, 1024
        $region28: #{tpu_custom_call.1} parent=23 // pred_fallthru
          _
        %s139 = sand.u32 %s40, 1
        %s140 = scalar_lea.sflag [#allocation3], %s139
        %s141 = sand.u32 %s40, 1
        %s142 = smul.addr %s141, 64
        %s143 = scalar_lea.vmem [#allocation2], %s142
        %p144 = pneg %p53
        %p145 = pneg %p50
        %p146 = pneg %p81
        %p147 = pneg %p78
        %s148 = sand.u32 %s68, 1
        %s149 = scalar_lea.sflag [#allocation4], %s148
        %s150 = sand.u32 %s68, 1
        %s151 = smul.addr %s150, 8
        %s152 = scalar_lea.vmem [#allocation5], %s151
        %s153 = smul.u32 2, %s23
        %s154 = smul.u32 %s23, 16
        %v155 = vld [vmem:[%s134] sm:$0xff]
        %v156 = vld [vmem:[%s134 + $0x8] sm:$0xff]
        %v157 = vld [vmem:[%s134 + $0x10] sm:$0xff]
        %v158 = vld [vmem:[%s134 + $0x18] sm:$0xff]
        %v159 = vld [vmem:[%s134 + $0x20] sm:$0xff]
        %v160 = vld [vmem:[%s134 + $0x28] sm:$0xff]
        %v161 = vld [vmem:[%s134 + $0x30] sm:$0xff]
        %v162 = vld [vmem:[%s134 + $0x38] sm:$0xff]
        %v163 = vlaneseq
        %v164 = vand.u32 %v163, 127
        %v165 = vlaneseq
        %v166 = vshrl.u32 %v165, 7
        %v167 = vadd.s32 %v166, 8
        %vm168 = vcmp.eq.s32.totalorder %v164, 15
        %v169 = vstv %s154
        %v170 = vadd.s32 %v166, %v169
        %v171 = vadd.s32 %v167, %v169
        %vm172 = vcmp.eq.s32.totalorder %v170, 15
        %vm173 = vcmp.eq.s32.totalorder %v171, 15
        %vm174 = vcmask 1047680
        %175 = vrot.lane.b32.xlu0 %v155, 16
        %v176 = vpop.permute.xlu0 %175
        %v177 = vsel %vm174, %v176, %v155
        %178 = vrot.lane.b32.xlu0 %v156, 16
        %v179 = vpop.permute.xlu0 %178
        %v180 = vsel %vm174, %v179, %v156
        %181 = vrot.lane.b32.xlu0 %v157, 16
        %v182 = vpop.permute.xlu0 %181
        %v183 = vsel %vm174, %v182, %v157
        %184 = vrot.lane.b32.xlu0 %v158, 16
        %v185 = vpop.permute.xlu0 %184
        %v186 = vsel %vm174, %v185, %v158
        %187 = vrot.lane.b32.xlu0 %v159, 16
        %v188 = vpop.permute.xlu0 %187
        %v189 = vsel %vm174, %v188, %v159
        %190 = vrot.lane.b32.xlu0 %v160, 16
        %v191 = vpop.permute.xlu0 %190
        %v192 = vsel %vm174, %v191, %v160
        %193 = vrot.lane.b32.xlu0 %v161, 16
        %v194 = vpop.permute.xlu0 %193
        %v195 = vsel %vm174, %v194, %v161
        %196 = vrot.lane.b32.xlu0 %v162, 16
        %v197 = vpop.permute.xlu0 %196
        %v198 = vsel %vm174, %v197, %v162
        %199 = vrot.lane.b32.xlu0 %v177, 16
        %v200 = vpop.permute.xlu0 %199
        %201 = vrot.lane.b32.xlu0 %v180, 16
        %v202 = vpop.permute.xlu0 %201
        %203 = vrot.lane.b32.xlu0 %v183, 16
        %v204 = vpop.permute.xlu0 %203
        %205 = vrot.lane.b32.xlu0 %v186, 16
        %v206 = vpop.permute.xlu0 %205
        %207 = vrot.lane.b32.xlu0 %v189, 16
        %v208 = vpop.permute.xlu0 %207
        %209 = vrot.lane.b32.xlu0 %v192, 16
        %v210 = vpop.permute.xlu0 %209
        %211 = vrot.lane.b32.xlu0 %v195, 16
        %v212 = vpop.permute.xlu0 %211
        %213 = vrot.lane.b32.xlu0 %v198, 16
        %v214 = vpop.permute.xlu0 %213
        %v215 = vsel %vm174, %v200, %v155
        %v216 = vsel %vm174, %v202, %v156
        %v217 = vsel %vm174, %v204, %v157
        %v218 = vsel %vm174, %v206, %v158
        %v219 = vsel %vm174, %v208, %v159
        %v220 = vsel %vm174, %v210, %v160
        %v221 = vsel %vm174, %v212, %v161
        %v222 = vsel %vm174, %v214, %v162
        %231 = vrot.lane.b32.xlu0 %v215, 127
        %v232 = vpop.permute.xlu0 %231
        %233 = vrot.lane.b32.xlu0 %v216, 127
        %v234 = vpop.permute.xlu0 %233
        %235 = vrot.lane.b32.xlu0 %v217, 127
        %v236 = vpop.permute.xlu0 %235
        %237 = vrot.lane.b32.xlu0 %v218, 127
        %v238 = vpop.permute.xlu0 %237
        %239 = vrot.lane.b32.xlu0 %v219, 127
        %v240 = vpop.permute.xlu0 %239
        %241 = vrot.lane.b32.xlu0 %v220, 127
        %v242 = vpop.permute.xlu0 %241
        %243 = vrot.lane.b32.xlu0 %v221, 127
        %v244 = vpop.permute.xlu0 %243
        %245 = vrot.lane.b32.xlu0 %v222, 127
        %v246 = vpop.permute.xlu0 %245
        %v255 = vsub.f32 %v155, %v232
        %v256 = vsub.f32 %v156, %v234
        %v257 = vsub.f32 %v157, %v236
        %v258 = vsub.f32 %v158, %v238
        %v259 = vsub.f32 %v159, %v240
        %v260 = vsub.f32 %v160, %v242
        %v261 = vsub.f32 %v161, %v244
        %v262 = vsub.f32 %v162, %v246
        %v263 = vsel %vm168, 1, 0
        %vm264 = vcmp.eq.s32.totalorder %v263, 1
        %v265 = vsel %vm264, 0.0, %v255
        %v266 = vsel %vm264, 0.0, %v256
        %v267 = vsel %vm264, 0.0, %v257
        %v268 = vsel %vm264, 0.0, %v258
        %v269 = vsel %vm264, 0.0, %v259
        %v270 = vsel %vm264, 0.0, %v260
        %v271 = vsel %vm264, 0.0, %v261
        %v272 = vsel %vm264, 0.0, %v262
        %v273 = vrot.slane %v155, 1
        %v274 = vrot.slane %v157, 1
        %v275 = vrot.slane %v159, 1
        %v276 = vrot.slane %v161, 1
        %v277 = vrot.slane %v156, 1
        %v278 = vrot.slane %v158, 1
        %v279 = vrot.slane %v160, 1
        %v280 = vrot.slane %v162, 1
        %vm281 = vcmp.lt.s32.totalorder %v166, 7
        %v282 = vsel %vm281, %v273, %v277
        %v283 = vsel %vm281, %v274, %v278
        %v284 = vsel %vm281, %v275, %v279
        %v285 = vsel %vm281, %v276, %v280
        %v286 = vsel %vm281, %v277, %v273
        %v287 = vsel %vm281, %v278, %v274
        %v288 = vsel %vm281, %v279, %v275
        %v289 = vsel %vm281, %v280, %v276
        %v290 = vsub.f32 %v155, %v282
        %v291 = vsub.f32 %v156, %v286
        %v292 = vsub.f32 %v157, %v283
        %v293 = vsub.f32 %v158, %v287
        %v294 = vsub.f32 %v159, %v284
        %v295 = vsub.f32 %v160, %v288
        %v296 = vsub.f32 %v161, %v285
        %v297 = vsub.f32 %v162, %v289
        %v298 = vsel %vm172, 1, 0
        %v299 = vsel %vm173, 1, 0
        %vm300 = vcmp.eq.s32.totalorder %v298, 1
        %vm301 = vcmp.eq.s32.totalorder %v299, 1
        %v302 = vsel %vm300, 0.0, %v290
        %v303 = vsel %vm301, 0.0, %v291
        %v304 = vsel %vm300, 0.0, %v292
        %v305 = vsel %vm301, 0.0, %v293
        %v306 = vsel %vm300, 0.0, %v294
        %v307 = vsel %vm301, 0.0, %v295
        %v308 = vsel %vm300, 0.0, %v296
        %v309 = vsel %vm301, 0.0, %v297
        %v310 = vmul.f32 %v265, %v265
        %v311 = vmul.f32 %v266, %v266
        %v312 = vmul.f32 %v267, %v267
        %v313 = vmul.f32 %v268, %v268
        %v314 = vmul.f32 %v269, %v269
        %v315 = vmul.f32 %v270, %v270
        %v316 = vmul.f32 %v271, %v271
        %v317 = vmul.f32 %v272, %v272
        %v318 = vmul.f32 %v302, %v302
        %v319 = vmul.f32 %v303, %v303
        %v320 = vmul.f32 %v304, %v304
        %v321 = vmul.f32 %v305, %v305
        %v322 = vmul.f32 %v306, %v306
        %v323 = vmul.f32 %v307, %v307
        %v324 = vmul.f32 %v308, %v308
        %v325 = vmul.f32 %v309, %v309
        %v326 = vadd.f32 %v310, %v318
        %v327 = vadd.f32 %v311, %v319
        %v328 = vadd.f32 %v312, %v320
        %v329 = vadd.f32 %v313, %v321
        %v330 = vadd.f32 %v314, %v322
        %v331 = vadd.f32 %v315, %v323
        %v332 = vadd.f32 %v316, %v324
        %v333 = vadd.f32 %v317, %v325
        %v334 = vadd.f32 %v326, 1e-08
        %v335 = vadd.f32 %v327, 1e-08
        %v336 = vadd.f32 %v328, 1e-08
        %v337 = vadd.f32 %v329, 1e-08
        %v338 = vadd.f32 %v330, 1e-08
        %v339 = vadd.f32 %v331, 1e-08
        %v340 = vadd.f32 %v332, 1e-08
        %v341 = vadd.f32 %v333, 1e-08
        %vm342 = vcmask 130048
        %v343 = vsel %vm342, %v334, 0.0
        %v344 = vsel %vm342, %v336, 0.0
        %v345 = vadd.f32 %v343, %v344
        %v346 = vsel %vm342, %v338, 0.0
        %v347 = vadd.f32 %v345, %v346
        %v348 = vsel %vm342, %v340, 0.0
        %v349 = vadd.f32 %v347, %v348
        %v350 = vsel %vm342, %v335, 0.0
        %v351 = vsel %vm342, %v337, 0.0
        %v352 = vadd.f32 %v350, %v351
        %v353 = vsel %vm342, %v339, 0.0
        %v354 = vadd.f32 %v352, %v353
        %v355 = vsel %vm342, %v341, 0.0
        %v356 = vadd.f32 %v354, %v355
        %v357 = vrcp.pop 4.0
        %v358 = vmul.f32 %v349, %v357
        %v359 = vmul.f32 %v356, %v357
        %v360 = vrsqrt.pop %v358
        %v361 = vmul.f32 %v358, %v360
        %vm362 = vcmp.eq.f32.partialorder %v358, inf
        %v363 = vsel %vm362, %v358, %v361
        %vm364 = vcmp.eq.f32.partialorder %v358, 0.0
        %v365 = vand.u32 %v358, 2147483648
        %v366 = vsel %vm364, %v365, %v363
        %v367 = vrsqrt.pop %v359
        %v368 = vmul.f32 %v359, %v367
        %vm369 = vcmp.eq.f32.partialorder %v359, inf
        %v370 = vsel %vm369, %v359, %v368
        %vm371 = vcmp.eq.f32.partialorder %v359, 0.0
        %v372 = vand.u32 %v359, 2147483648
        %v373 = vsel %vm371, %v372, %v370
        %v374 = vsel %vm342, %v366, 0.0
        %v375 = vsel %vm342, %v373, 0.0
        %v376 = vadd.f32 %v374, %v375
        %377 = vadd.xlane.f32.xlu0 %v376
        %v378 = vpop.xlane.xlu0 %377
        %v379 = vrot.slane %v378, 4
        %v380 = vadd.f32 %v378, %v379
        %v381 = vrot.slane %v380, 2
        %v382 = vadd.f32 %v380, %v381
        %v383 = vrot.slane %v382, 1
        %v384 = vadd.f32 %v382, %v383
        %s385 = vtos %v384
        %v386 = vstv %s385
        %387 = vst [vmem:[%s152] sm:$0xff] %v386
        %s388 = sand.u32 %s68, 1
        %s389 = scalar_lea.sflag [#allocation4], %s388
        %s390 = sand.u32 %s68, 1
        %s391 = smul.addr %s390, 8
        %s392 = scalar_lea.vmem [#allocation5], %s391
        // Predicated region
        $region29: #{tpu_custom_call.1} parent=23 // pred_check
          %p393 = pneg %p78
        $region30: #{tpu_custom_call.1} parent=23 // pred_check_branch
          %395 = sbr.rel (%p393) target = $region32
        $region31: #{tpu_custom_call.1} parent=23 // pred_region
          %s397 = ssub.s32 128, 128
          %398 = vsyncadd %s389, %s397
          %s399 = sadd.s32 %s23, %s22
          %s400 = smul.addr %s399, 128
          %s401 = scalar_lea.hbm %s1, %s400
          %s403 = sshll.u32 %s392, 4
          %s404 = int_to_ptr.vmem [resolvable:$true] %s403
          %406 = dma.vmem_to_hbm [thread:$0]  %s404, 128, %s401, %s389
        $region32: #{tpu_custom_call.1} parent=23 // pred_fallthru
          _
      $region24: #{tpu_custom_call.1} parent=5 // pred_fallthru
        _
      %p407 = scmp.le.s32.totalorder 2, %s13
      // Predicated region
      $region33: #{tpu_custom_call.1} parent=5 // pred_check
        %p408 = pneg %p407
      $region34: #{tpu_custom_call.1} parent=5 // pred_check_branch
        %410 = sbr.rel (%p408) target = $region36
      $region35: #{tpu_custom_call.1} parent=5 // pred_region
        %s411 = ssub.s32 %s13, 2
        // Predicated region
        $region37: #{tpu_custom_call.1} parent=35 // pred_check
          %p412 = pneg %p84
        $region38: #{tpu_custom_call.1} parent=35 // pred_check_branch
          %414 = sbr.rel (%p412) target = $region40
        $region39: #{tpu_custom_call.1} parent=35 // pred_region
          %s415 = sand.u32 %s69, 1
          %s416 = scalar_lea.sflag [#allocation4], %s415
          %s417 = sand.u32 %s69, 1
          %s418 = smul.addr %s417, 8
          %s419 = scalar_lea.vmem [#allocation5], %s418
          %420 = dma.done %s416, 128
        $region40: #{tpu_custom_call.1} parent=35 // pred_fallthru
          _
      $region36: #{tpu_custom_call.1} parent=5 // pred_fallthru
        _
    $region6: #{tpu_custom_call.1} parent=1 // loop_footer
      %s17 = sadd.s32 1, %s13
    $region7: #{tpu_custom_call.1} parent=1 // loop_footer_branch
      %12 = sbr.rel target = $region3
    $region8: #{tpu_custom_call.1} parent=1 // loop_exit
      _
    %421 = vsyncpa [#allocation3], 1
    %s422 = scalar_lea.sflag [#allocation3], 1
    %423 = vsyncpa %s422, 1
    %424 = vsyncpa [#allocation4], 1
    %s425 = scalar_lea.sflag [#allocation4], 1
    %426 = vsyncpa %s425, 1

</llo_original>
